<compile_context>
chip_gen: v7x
topology: tpu7x:2x2x1
jax: 0.10.0
libtpu: 0.0.40
codegen_flags: <defaults>
</compile_context>

<pallas_src>
from functools import partial, lru_cache

import numpy as np
import jax
import jax.numpy as jnp
from jax.experimental import pallas as pl
from jax.experimental.pallas import tpu as pltpu

_LANE = 128
_SUBLANE = 8
_VMEM_BUDGET = 36 << 20   # per-TensorCore working-set cap (v7x has 64 MiB / TC)


def _round_up(x, m):
    return (x + m - 1) // m * m


# ------------------------------- Pallas kernel ------------------------------ #

def _fused_loss_kernel(a_ref, b_ref, gs_ref, cpt_ref, *rest,
                       rows_total, tile, tiles_per_core, compute_match):
    """Fused gridded reduction.

    Every (c, k) grid step streams one lane-dense (tile, 128) block of
    RECS/INPUTS and accumulates per-lane squared error into `acc_ref` (pure
    VPU).  Rows past the end of the slab (ragged last tile / phantom tiles of
    the parallel split) are masked before squaring.  On the last k step the
    accumulator is reduced once; core 0 additionally computes the two tiny BCE
    sums.  The scalars are packed into a lane-dense (1, 128) output row:
        [sse_partial, bce_prob_sum, bce_logits_sum, 0, ...].
    """
    if compute_match:
        r_ref, cs_ref, out_ref, acc_ref = rest
    else:
        r_ref = cs_ref = None
        out_ref, acc_ref = rest

    c = pl.program_id(0)
    k = pl.program_id(1)

    # Row-granular tail mask: rows at or beyond rows_total are garbage (partial
    # block DMA) or duplicates (clamped phantom tile) -> contribute zero.
    row_base = (c * tiles_per_core + k) * tile
    row = jax.lax.broadcasted_iota(jnp.int32, (tile, _LANE), 0)
    valid = (row_base + row) < rows_total

    d = a_ref[...].astype(jnp.float32) - b_ref[...].astype(jnp.float32)
    d = jnp.where(valid, d, 0.0)
    sq = d * d

    @pl.when(k == 0)
    def _first():
        acc_ref[...] = sq

    @pl.when(k != 0)
    def _accum():
        acc_ref[...] += sq

    @pl.when(k == pl.num_programs(1) - 1)
    def _finalize():
        sse = jnp.sum(acc_ref[...])
        lane = jax.lax.broadcasted_iota(jnp.int32, (1, _LANE), 1)
        out_ref[...] = jnp.where(lane == 0, sse, 0.0)

        # Tiny BCE epilogues: only core 0's results are consumed downstream.
        @pl.when(c == 0)
        def _bce():
            # BCE on probabilities: binary_cross_entropy(gs, concepts, 'sum').
            # PyTorch clamps the logs at -100.
            p = gs_ref[...].astype(jnp.float32)
            t = cpt_ref[...].astype(jnp.float32)
            logp = jnp.maximum(jnp.log(p), -100.0)
            log1mp = jnp.maximum(jnp.log(1.0 - p), -100.0)
            bce1 = jnp.sum(-(t * logp + (1.0 - t) * log1mp))
            extra = jnp.where(lane == 1, bce1, 0.0)

            if compute_match:
                # BCE on sigmoid(logits) via log-sigmoid / softplus identities:
                #   log(sigmoid(x))     = -softplus(-x)
                #   log(1 - sigmoid(x)) = -softplus(x)
                x = r_ref[...].astype(jnp.float32)
                tc = cs_ref[...].astype(jnp.float32)
                sp = jnp.log1p(jnp.exp(-jnp.abs(x)))            # softplus(-|x|)
                log_sig = jnp.maximum(-(jnp.maximum(-x, 0.0) + sp), -100.0)
                log_1msig = jnp.maximum(-(jnp.maximum(x, 0.0) + sp), -100.0)
                bce2 = jnp.sum(-(tc * log_sig + (1.0 - tc) * log_1msig))
                extra = extra + jnp.where(lane == 2, bce2, 0.0)

            out_ref[...] = out_ref[...] + extra


# ------------------------------ Wrapper helpers ----------------------------- #

def _prep_slab(x):
    """Reshape to a lane-dense [rows, 128] slab in the input's native dtype.
    Metadata-only when numel % 128 == 0 (the common image case)."""
    flat = x.reshape(-1)
    n = flat.shape[0]
    rem = n % _LANE
    if rem:
        # TODO(synk): rare path — numel not a multiple of 128 forces one HBM
        # copy (pad to the next lane boundary).  The zero padding is identical
        # in both slabs so it contributes 0 to the SSE.
        flat = jnp.pad(flat, (0, _LANE - rem))
    return flat.reshape(-1, _LANE)


@lru_cache(maxsize=None)
def _dual_tensorcore():
    """True on chips with 2 TensorCores addressable per device (v4/v5p/v7x)."""
    try:
        kind = jax.devices()[0].device_kind.lower()
    except Exception:
        return False
    if "lite" in kind or "v5e" in kind or "v6e" in kind or "v6 " in kind:
        return False
    return any(tag in kind for tag in ("v4", "v5p", "v7", "tpu7"))


def _pick_tiling(rows, itemsize_sum, max_tile_rows):
    """Fixed tile (multiple of 8 rows) bounded by the VMEM budget; grid covers
    rows via cdiv + in-kernel masking (no tile-collapse for awkward shapes)."""
    # double-buffered a/b tiles + f32 accumulator, per row of 128 lanes
    per_row = 2 * _LANE * itemsize_sum + _LANE * 4
    cap = max(_SUBLANE, (_VMEM_BUDGET // per_row) // _SUBLANE * _SUBLANE)
    tile = min(int(max_tile_rows), cap, _round_up(rows, _SUBLANE))
    tile = max(_SUBLANE, tile // _SUBLANE * _SUBLANE)
    tiles_total = pl.cdiv(rows, tile)
    n_par = 2 if (_dual_tensorcore() and tiles_total >= 2) else 1
    tiles_per_core = pl.cdiv(tiles_total, n_par)
    return tile, tiles_total, tiles_per_core, n_par


def precompute_concept_columns(concepts, usedC=6):
    """Resolve the data-dependent mask (concepts[0, :] != -1) to static column
    indices ONCE, outside the jitted loss (concept layout is fixed per dataset)."""
    m = np.asarray(concepts)[0, :] != -1.0
    return tuple(int(i) for i in np.nonzero(m)[0][:usedC])


# --------------------------------- Loss fn ---------------------------------- #

@partial(jax.jit, static_argnames=("beta", "w_c", "col_idx", "max_tile_rows"))
def concept_vae_loss(recs, inputs, concepts, gs, latents, *,
                     beta, w_c, col_idx=(), max_tile_rows=8192):
    assert recs.shape == inputs.shape

    a_slab = _prep_slab(recs)      # keep native dtype (bf16 stays bf16)
    b_slab = _prep_slab(inputs)
    rows = a_slab.shape[0]
    itemsize_a = jnp.dtype(a_slab.dtype).itemsize
    itemsize_b = jnp.dtype(b_slab.dtype).itemsize
    tile, tiles_total, tiles_per_core, n_par = _pick_tiling(
        rows, itemsize_a + itemsize_b, max_tile_rows)

    use_match = (w_c > 0) and (len(col_idx) > 0)
    small_inputs = [gs, concepts]
    if use_match:
        idx = jnp.asarray(col_idx, dtype=jnp.int32)
        r_sel = jnp.take(latents, idx, axis=1)   # reprs[:, :nC][:, mask][:, :usedC]
        c_sel = jnp.take(concepts, idx, axis=1)
        small_inputs += [r_sel, c_sel]

    def slab_index_map(c, k):
        # Clamp so phantom tiles (parallel split of an odd tile count) never
        # request a fully out-of-bounds block; they are masked in-kernel.
        return (jnp.minimum(c * tiles_per_core + k, tiles_total - 1), 0)

    in_specs = [
        pl.BlockSpec((tile, _LANE), slab_index_map),
        pl.BlockSpec((tile, _LANE), slab_index_map),
    ] + [
        pl.BlockSpec(x.shape, lambda c, k, nd=x.ndim: (0,) * nd)
        for x in small_inputs
    ]

    slab_bytes = a_slab.size * itemsize_a + b_slab.size * itemsize_b
    small_bytes = sum(int(x.size) * jnp.dtype(x.dtype).itemsize
                      for x in small_inputs)
    cost = pl.CostEstimate(
        flops=3 * int(a_slab.size) + 10 * sum(int(x.size) for x in small_inputs),
        transcendentals=2 * sum(int(x.size) for x in small_inputs),
        bytes_accessed=int(slab_bytes + small_bytes + n_par * _LANE * 4),
    )
    # VMEM: double-buffered slab tiles + f32 accumulator + small inputs + slack.
    vmem_limit = int(2 * tile * _LANE * (itemsize_a + itemsize_b)
                     + tile * _LANE * 4 + 4 * small_bytes + (4 << 20))
    vmem_limit = min(max(vmem_limit, 8 << 20), 60 << 20)

    kernel = partial(_fused_loss_kernel,
                     rows_total=rows, tile=tile,
                     tiles_per_core=tiles_per_core,
                     compute_match=use_match)

    out = pl.pallas_call(
        kernel,
        out_shape=jax.ShapeDtypeStruct((n_par, _LANE), jnp.float32),
        grid_spec=pltpu.PrefetchScalarGridSpec(
            num_scalar_prefetch=0,
            grid=(n_par, tiles_per_core),
            in_specs=in_specs,
            out_specs=pl.BlockSpec((1, _LANE), lambda c, k: (c, 0)),
            scratch_shapes=[pltpu.VMEM((tile, _LANE), jnp.float32)],
        ),
        compiler_params=pltpu.CompilerParams(
            dimension_semantics=("parallel", "arbitrary"),
            vmem_limit_bytes=vmem_limit,
        ),
        cost_estimate=cost,
    )(a_slab, b_slab, *small_inputs)

    # ---- conceptVAE_ELBO ---------------------------------------------------- #
    sse = jnp.sum(out[:, 0])                 # per-core partial SSE -> total
    recon = sse / float(recs.size)           # mse_loss(..., reduction='mean')
    kld = out[0, 1] / float(gs.size)         # binary_cross_entropy(..., 'mean')
    loss1 = recon + beta * kld
    losses = {'recon-loss': recon, 'kld': kld}

    if w_c <= 0:
        return loss1, losses

    # ---- VAE_Concept_Match --------------------------------------------------- #
    if use_match:
        denom = float(len(col_idx) * concepts.shape[0])
        loss2 = out[0, 2] / denom            # ones-weight BCE, reduction='mean'
    else:
        loss2 = jnp.zeros((), jnp.float32)
    losses['c-loss'] = loss2
    return loss1 + w_c * loss2, losses


# -------------------------------- Reference --------------------------------- #

def _reference(recs, inputs, concepts, gs, latents, *, beta, w_c, usedC=6):
    recs = np.asarray(recs, np.float64)
    inputs = np.asarray(inputs, np.float64)
    concepts = np.asarray(concepts, np.float64)
    gs = np.asarray(gs, np.float64)
    latents = np.asarray(latents, np.float64)

    recon = np.mean((recs - inputs) ** 2)
    bce = -(concepts * np.maximum(np.log(gs), -100.0)
            + (1 - concepts) * np.maximum(np.log(1 - gs), -100.0))
    kld = np.mean(bce)
    loss1 = recon + beta * kld
    if w_c <= 0:
        return loss1

    nC = concepts.shape[-1]
    reprs_c = latents[:, :nC]
    mask = concepts[0, :] != -1.0
    loss2 = 0.0
    if mask.sum() > 0:
        r = reprs_c[:, mask][:, :usedC]
        c = concepts[:, mask][:, :usedC]
        p = 1.0 / (1.0 + np.exp(-r))
        b = -(c * np.maximum(np.log(p), -100.0)
              + (1 - c) * np.maximum(np.log(1 - p), -100.0))
        loss2 = np.mean(b)
    return loss1 + w_c * loss2


# ----------------------------------- Main ------------------------------------ #

if __name__ == "__main__":
    key = jax.random.PRNGKey(0)
    k1, k2, k3, k4, k5 = jax.random.split(key, 5)

    # NCHW images -> 2560 elems -> 20 lane-dense rows (NOT a multiple of the
    # 8-row tile used below, so the in-kernel ragged-tail mask is exercised).
    B, C, H, W = 2, 4, 16, 20
    nC = 8                          # number of concepts
    latent_dim = 32
    usedC = 6
    beta, w_c = 2.0, 1.0

    inputs = jax.random.uniform(k1, (B, C, H, W), jnp.float32)
    recs = jax.random.uniform(k2, (B, C, H, W), jnp.float32)
    gs = jax.nn.sigmoid(jax.random.normal(k3, (B, nC), jnp.float32))
    concepts = jax.random.bernoulli(k4, 0.5, (B, nC)).astype(jnp.float32)
    latents = jax.random.normal(k5, (B, latent_dim), jnp.float32)

    # Static resolution of the data-dependent concept mask (done once, off the
    # jitted hot path).
    col_idx = precompute_concept_columns(concepts, usedC=usedC)

    # max_tile_rows=8 at this toy size forces a multi-tile grid so the
    # pipelined accumulate / masked-tail / finalize path is exercised;
    # production calls use the default 8192-row tile.
    loss, losses = concept_vae_loss(
        recs, inputs, concepts, gs, latents,
        beta=beta, w_c=w_c, col_idx=col_idx, max_tile_rows=8)
    loss = jax.block_until_ready(loss)

    ref = _reference(recs, inputs, concepts, gs, latents,
                     beta=beta, w_c=w_c, usedC=usedC)
    np.testing.assert_allclose(float(loss), float(ref), rtol=3e-5, atol=1e-5)

    print("KERNEL_OK")
</pallas_src>

<mosaic_0001>
module attributes {stable_mosaic.version = 11 : i64} {
  func.func @_fused_loss_kernel(%arg0: i32, %arg1: i32, %arg2: memref<8x128xf32, #tpu.memory_space<vmem>>, %arg3: memref<8x128xf32, #tpu.memory_space<vmem>>, %arg4: memref<2x8xf32, #tpu.memory_space<vmem>>, %arg5: memref<2x8xf32, #tpu.memory_space<vmem>>, %arg6: memref<2x6xf32, #tpu.memory_space<vmem>>, %arg7: memref<2x6xf32, #tpu.memory_space<vmem>>, %arg8: memref<1x128xf32, #tpu.memory_space<vmem>>, %arg9: memref<8x128xf32, #tpu.memory_space<vmem>>) attributes {dimension_semantics = [#tpu.dimension_semantics<parallel>, #tpu.dimension_semantics<arbitrary>], iteration_bounds = array<i64: 1, 3>, scalar_prefetch = 0 : i64, scratch_operands = 1 : i64, tpu.core_type = #tpu.core_type<tc>, window_params = [{transform_indices = @transform_0, window_bounds = array<i64: 8, 128>}, {transform_indices = @transform_1, window_bounds = array<i64: 8, 128>}, {pipeline_mode = #tpu.pipeline_mode<synchronous>, transform_indices = @transform_2, window_bounds = array<i64: 2, 8>}, {pipeline_mode = #tpu.pipeline_mode<synchronous>, transform_indices = @transform_3, window_bounds = array<i64: 2, 8>}, {pipeline_mode = #tpu.pipeline_mode<synchronous>, transform_indices = @transform_4, window_bounds = array<i64: 2, 6>}, {pipeline_mode = #tpu.pipeline_mode<synchronous>, transform_indices = @transform_5, window_bounds = array<i64: 2, 6>}, {transform_indices = @transform_6, window_bounds = array<i64: 1, 128>}]} {
    %c3_i32 = arith.constant 3 : i32
    %0 = arith.muli %arg0, %c3_i32 : i32
    %1 = arith.addi %0, %arg1 : i32
    %c8_i32 = arith.constant 8 : i32
    %2 = arith.muli %1, %c8_i32 : i32
    %3 = tpu.iota {dimensions = array<i32: 0>} : vector<8x128xi32>
    %4 = vector.broadcast %2 : i32 to vector<8x128xi32>
    %5 = arith.addi %4, %3 : vector<8x128xi32>
    %c20_i32 = arith.constant 20 : i32
    %6 = vector.broadcast %c20_i32 : i32 to vector<8x128xi32>
    %7 = arith.cmpi slt, %5, %6 : vector<8x128xi32>
    %c0 = arith.constant 0 : index
    %c0_0 = arith.constant 0 : index
    %8 = vector.load %arg2[%c0, %c0_0] : memref<8x128xf32, #tpu.memory_space<vmem>>, vector<8x128xf32>
    %c0_1 = arith.constant 0 : index
    %c0_2 = arith.constant 0 : index
    %9 = vector.load %arg3[%c0_1, %c0_2] : memref<8x128xf32, #tpu.memory_space<vmem>>, vector<8x128xf32>
    %10 = arith.subf %8, %9 : vector<8x128xf32>
    %cst = arith.constant 0.000000e+00 : f32
    %11 = vector.broadcast %cst : f32 to vector<8x128xf32>
    %12 = arith.select %7, %10, %11 : vector<8x128xi1>, vector<8x128xf32>
    %13 = arith.mulf %12, %12 : vector<8x128xf32>
    %c0_i32 = arith.constant 0 : i32
    %14 = arith.cmpi eq, %arg1, %c0_i32 : i32
    %15 = arith.extui %14 : i1 to i32
    %c0_i32_3 = arith.constant 0 : i32
    %16 = arith.cmpi ne, %15, %c0_i32_3 : i32
    scf.if %16 {
      %c0_7 = arith.constant 0 : index
      %c0_8 = arith.constant 0 : index
      %23 = vector.load %arg9[%c0_7, %c0_8] : memref<8x128xf32, #tpu.memory_space<vmem>>, vector<8x128xf32>
      tpu.vector_store %arg9[%c0_7, %c0_8], %13 {strides = array<i32>} : memref<8x128xf32, #tpu.memory_space<vmem>>, vector<8x128xf32>,
    } else {
    }
    %c0_i32_4 = arith.constant 0 : i32
    %17 = arith.cmpi ne, %arg1, %c0_i32_4 : i32
    %18 = arith.extui %17 : i1 to i32
    %c0_i32_5 = arith.constant 0 : i32
    %19 = arith.cmpi ne, %18, %c0_i32_5 : i32
    scf.if %19 {
      %c0_7 = arith.constant 0 : index
      %c0_8 = arith.constant 0 : index
      %23 = vector.load %arg9[%c0_7, %c0_8] : memref<8x128xf32, #tpu.memory_space<vmem>>, vector<8x128xf32>
      %24 = arith.addf %23, %13 : vector<8x128xf32>
      %c0_9 = arith.constant 0 : index
      %c0_10 = arith.constant 0 : index
      %25 = vector.load %arg9[%c0_9, %c0_10] : memref<8x128xf32, #tpu.memory_space<vmem>>, vector<8x128xf32>
      tpu.vector_store %arg9[%c0_9, %c0_10], %24 {strides = array<i32>} : memref<8x128xf32, #tpu.memory_space<vmem>>, vector<8x128xf32>,
    } else {
    }
    %c2_i32 = arith.constant 2 : i32
    %20 = arith.cmpi eq, %arg1, %c2_i32 : i32
    %21 = arith.extui %20 : i1 to i32
    %c0_i32_6 = arith.constant 0 : i32
    %22 = arith.cmpi ne, %21, %c0_i32_6 : i32
    scf.if %22 {
      %c0_7 = arith.constant 0 : index
      %c0_8 = arith.constant 0 : index
      %23 = vector.load %arg9[%c0_7, %c0_8] : memref<8x128xf32, #tpu.memory_space<vmem>>, vector<8x128xf32>
      %24 = vector.shape_cast %23 : vector<8x128xf32> to vector<1x8x128xf32>
      %cst_9 = arith.constant dense<0.000000e+00> : vector<1xf32>
      %25 = vector.multi_reduction <add>, %24, %cst_9 [1, 2] : vector<1x8x128xf32> to vector<1xf32>
      %26 = vector.shape_cast %25 : vector<1xf32> to vector<1x1x1xf32>
      %27 = vector.extract %26[0, 0, 0] : f32 from vector<1x1x1xf32>
      %28 = tpu.iota {dimensions = array<i32: 1>} : vector<1x128xi32>
      %c0_i32_10 = arith.constant 0 : i32
      %29 = vector.broadcast %c0_i32_10 : i32 to vector<1x128xi32>
      %30 = arith.cmpi eq, %28, %29 : vector<1x128xi32>
      %cst_11 = arith.constant 0.000000e+00 : f32
      %31 = vector.broadcast %27 : f32 to vector<1x128xf32>
      %32 = vector.broadcast %cst_11 : f32 to vector<1x128xf32>
      %33 = arith.select %30, %31, %32 : vector<1x128xi1>, vector<1x128xf32>
      %c0_12 = arith.constant 0 : index
      %c0_13 = arith.constant 0 : index
      %34 = vector.load %arg8[%c0_12, %c0_13] : memref<1x128xf32, #tpu.memory_space<vmem>>, vector<1x128xf32>
      tpu.vector_store %arg8[%c0_12, %c0_13], %33 {strides = array<i32>} : memref<1x128xf32, #tpu.memory_space<vmem>>, vector<1x128xf32>,
      %c0_i32_14 = arith.constant 0 : i32
      %35 = arith.cmpi eq, %arg0, %c0_i32_14 : i32
      %36 = arith.extui %35 : i1 to i32
      %c0_i32_15 = arith.constant 0 : i32
      %37 = arith.cmpi ne, %36, %c0_i32_15 : i32
      scf.if %37 {
        %c0_16 = arith.constant 0 : index
        %c0_17 = arith.constant 0 : index
        %38 = vector.load %arg4[%c0_16, %c0_17] : memref<2x8xf32, #tpu.memory_space<vmem>>, vector<2x8xf32>
        %c0_18 = arith.constant 0 : index
        %c0_19 = arith.constant 0 : index
        %39 = vector.load %arg5[%c0_18, %c0_19] : memref<2x8xf32, #tpu.memory_space<vmem>>, vector<2x8xf32>
        %40 = math.log %38 : vector<2x8xf32>
        %cst_20 = arith.constant -1.000000e+02 : f32
        %41 = vector.broadcast %cst_20 : f32 to vector<2x8xf32>
        %42 = arith.maximumf %40, %41 : vector<2x8xf32>
        %cst_21 = arith.constant 1.000000e+00 : f32
        %43 = vector.broadcast %cst_21 : f32 to vector<2x8xf32>
        %44 = arith.subf %43, %38 : vector<2x8xf32>
        %45 = math.log %44 : vector<2x8xf32>
        %cst_22 = arith.constant -1.000000e+02 : f32
        %46 = vector.broadcast %cst_22 : f32 to vector<2x8xf32>
        %47 = arith.maximumf %45, %46 : vector<2x8xf32>
        %48 = arith.mulf %39, %42 : vector<2x8xf32>
        %cst_23 = arith.constant 1.000000e+00 : f32
        %49 = vector.broadcast %cst_23 : f32 to vector<2x8xf32>
        %50 = arith.subf %49, %39 : vector<2x8xf32>
        %51 = arith.mulf %50, %47 : vector<2x8xf32>
        %52 = arith.addf %48, %51 : vector<2x8xf32>
        %cst_24 = arith.constant 0.000000e+00 : f32
        %53 = vector.broadcast %cst_24 : f32 to vector<2x8xf32>
        %54 = arith.subf %53, %52 : vector<2x8xf32>
        %55 = vector.shape_cast %54 : vector<2x8xf32> to vector<1x2x8xf32>
        %cst_25 = arith.constant dense<0.000000e+00> : vector<1xf32>
        %56 = vector.multi_reduction <add>, %55, %cst_25 [1, 2] : vector<1x2x8xf32> to vector<1xf32>
        %57 = vector.shape_cast %56 : vector<1xf32> to vector<1x1x1xf32>
        %58 = vector.extract %57[0, 0, 0] : f32 from vector<1x1x1xf32>
        %c1_i32 = arith.constant 1 : i32
        %59 = vector.broadcast %c1_i32 : i32 to vector<1x128xi32>
        %60 = arith.cmpi eq, %28, %59 : vector<1x128xi32>
        %cst_26 = arith.constant 0.000000e+00 : f32
        %61 = vector.broadcast %58 : f32 to vector<1x128xf32>
        %62 = vector.broadcast %cst_26 : f32 to vector<1x128xf32>
        %63 = arith.select %60, %61, %62 : vector<1x128xi1>, vector<1x128xf32>
        %c0_27 = arith.constant 0 : index
        %c0_28 = arith.constant 0 : index
        %64 = vector.load %arg6[%c0_27, %c0_28] : memref<2x6xf32, #tpu.memory_space<vmem>>, vector<2x6xf32>
        %c0_29 = arith.constant 0 : index
        %c0_30 = arith.constant 0 : index
        %65 = vector.load %arg7[%c0_29, %c0_30] : memref<2x6xf32, #tpu.memory_space<vmem>>, vector<2x6xf32>
        %66 = math.absf %64 : vector<2x6xf32>
        %cst_31 = arith.constant 0.000000e+00 : f32
        %67 = vector.broadcast %cst_31 : f32 to vector<2x6xf32>
        %68 = arith.subf %67, %66 : vector<2x6xf32>
        %69 = math.exp %68 : vector<2x6xf32>
        %70 = math.log1p %69 : vector<2x6xf32>
        %cst_32 = arith.constant 0.000000e+00 : f32
        %71 = vector.broadcast %cst_32 : f32 to vector<2x6xf32>
        %72 = arith.subf %71, %64 : vector<2x6xf32>
        %cst_33 = arith.constant 0.000000e+00 : f32
        %73 = vector.broadcast %cst_33 : f32 to vector<2x6xf32>
        %74 = arith.maximumf %72, %73 : vector<2x6xf32>
        %75 = arith.addf %74, %70 : vector<2x6xf32>
        %cst_34 = arith.constant 0.000000e+00 : f32
        %76 = vector.broadcast %cst_34 : f32 to vector<2x6xf32>
        %77 = arith.subf %76, %75 : vector<2x6xf32>
        %cst_35 = arith.constant -1.000000e+02 : f32
        %78 = vector.broadcast %cst_35 : f32 to vector<2x6xf32>
        %79 = arith.maximumf %77, %78 : vector<2x6xf32>
        %cst_36 = arith.constant 0.000000e+00 : f32
        %80 = vector.broadcast %cst_36 : f32 to vector<2x6xf32>
        %81 = arith.maximumf %64, %80 : vector<2x6xf32>
        %82 = arith.addf %81, %70 : vector<2x6xf32>
        %cst_37 = arith.constant 0.000000e+00 : f32
        %83 = vector.broadcast %cst_37 : f32 to vector<2x6xf32>
        %84 = arith.subf %83, %82 : vector<2x6xf32>
        %cst_38 = arith.constant -1.000000e+02 : f32
        %85 = vector.broadcast %cst_38 : f32 to vector<2x6xf32>
        %86 = arith.maximumf %84, %85 : vector<2x6xf32>
        %87 = arith.mulf %65, %79 : vector<2x6xf32>
        %cst_39 = arith.constant 1.000000e+00 : f32
        %88 = vector.broadcast %cst_39 : f32 to vector<2x6xf32>
        %89 = arith.subf %88, %65 : vector<2x6xf32>
        %90 = arith.mulf %89, %86 : vector<2x6xf32>
        %91 = arith.addf %87, %90 : vector<2x6xf32>
        %cst_40 = arith.constant 0.000000e+00 : f32
        %92 = vector.broadcast %cst_40 : f32 to vector<2x6xf32>
        %93 = arith.subf %92, %91 : vector<2x6xf32>
        %94 = vector.shape_cast %93 : vector<2x6xf32> to vector<1x2x6xf32>
        %cst_41 = arith.constant dense<0.000000e+00> : vector<1xf32>
        %95 = vector.multi_reduction <add>, %94, %cst_41 [1, 2] : vector<1x2x6xf32> to vector<1xf32>
        %96 = vector.shape_cast %95 : vector<1xf32> to vector<1x1x1xf32>
        %97 = vector.extract %96[0, 0, 0] : f32 from vector<1x1x1xf32>
        %c2_i32_42 = arith.constant 2 : i32
        %98 = vector.broadcast %c2_i32_42 : i32 to vector<1x128xi32>
        %99 = arith.cmpi eq, %28, %98 : vector<1x128xi32>
        %cst_43 = arith.constant 0.000000e+00 : f32
        %100 = vector.broadcast %97 : f32 to vector<1x128xf32>
        %101 = vector.broadcast %cst_43 : f32 to vector<1x128xf32>
        %102 = arith.select %99, %100, %101 : vector<1x128xi1>, vector<1x128xf32>
        %103 = arith.addf %63, %102 : vector<1x128xf32>
        %c0_44 = arith.constant 0 : index
        %c0_45 = arith.constant 0 : index
        %104 = vector.load %arg8[%c0_44, %c0_45] : memref<1x128xf32, #tpu.memory_space<vmem>>, vector<1x128xf32>
        %105 = arith.addf %104, %103 : vector<1x128xf32>
        %c0_46 = arith.constant 0 : index
        %c0_47 = arith.constant 0 : index
        %106 = vector.load %arg8[%c0_46, %c0_47] : memref<1x128xf32, #tpu.memory_space<vmem>>, vector<1x128xf32>
        tpu.vector_store %arg8[%c0_46, %c0_47], %105 {strides = array<i32>} : memref<1x128xf32, #tpu.memory_space<vmem>>, vector<1x128xf32>,
      } else {
      }
    } else {
    }
    return
  }
  func.func @transform_0(%arg0: i32, %arg1: i32) -> (i32, i32) {
    %c3_i32 = arith.constant 3 : i32
    %0 = arith.muli %arg0, %c3_i32 : i32
    %1 = arith.addi %0, %arg1 : i32
    %c2_i32 = arith.constant 2 : i32
    %2 = arith.minsi %1, %c2_i32 : i32
    %c0_i32 = arith.constant 0 : i32
    %c0_i32_0 = arith.constant 0 : i32
    return %2, %c0_i32 : i32, i32
  }
  func.func @transform_1(%arg0: i32, %arg1: i32) -> (i32, i32) {
    %c3_i32 = arith.constant 3 : i32
    %0 = arith.muli %arg0, %c3_i32 : i32
    %1 = arith.addi %0, %arg1 : i32
    %c2_i32 = arith.constant 2 : i32
    %2 = arith.minsi %1, %c2_i32 : i32
    %c0_i32 = arith.constant 0 : i32
    %c0_i32_0 = arith.constant 0 : i32
    return %2, %c0_i32 : i32, i32
  }
  func.func @transform_2(%arg0: i32, %arg1: i32) -> (i32, i32) {
    %c0_i32 = arith.constant 0 : i32
    %c0_i32_0 = arith.constant 0 : i32
    %c0_i32_1 = arith.constant 0 : i32
    return %c0_i32, %c0_i32_0 : i32, i32
  }
  func.func @transform_3(%arg0: i32, %arg1: i32) -> (i32, i32) {
    %c0_i32 = arith.constant 0 : i32
    %c0_i32_0 = arith.constant 0 : i32
    %c0_i32_1 = arith.constant 0 : i32
    return %c0_i32, %c0_i32_0 : i32, i32
  }
  func.func @transform_4(%arg0: i32, %arg1: i32) -> (i32, i32) {
    %c0_i32 = arith.constant 0 : i32
    %c0_i32_0 = arith.constant 0 : i32
    %c0_i32_1 = arith.constant 0 : i32
    return %c0_i32, %c0_i32_0 : i32, i32
  }
  func.func @transform_5(%arg0: i32, %arg1: i32) -> (i32, i32) {
    %c0_i32 = arith.constant 0 : i32
    %c0_i32_0 = arith.constant 0 : i32
    %c0_i32_1 = arith.constant 0 : i32
    return %c0_i32, %c0_i32_0 : i32, i32
  }
  func.func @transform_6(%arg0: i32, %arg1: i32) -> (i32, i32) {
    %c0_i32 = arith.constant 0 : i32
    %c0_i32_0 = arith.constant 0 : i32
    return %arg0, %c0_i32 : i32, i32
  }
}

</mosaic_0001>

<llo_original>
// kernel: concept_vae_loss.1
$region0: #{concept_vae_loss.1}
  #allocation0 [shape = 'u32[]', space=smem, size = 0x4, offset = 0x4, fixed_abs, tag = 'smem constant byte address 0x4 - core index']
  #allocation1 [shape = 'u32[144,128]{1,0:T(1,128)}', space=vmem, size = 0x12000, scoped, tag = 'internal scratch']
  #allocation2 [shape = 'f32[8,128]{1,0:T(8,128)}', space=vmem, size = 0x1000, scoped, tag = 'scratch operand']
  %s0 = inlined_call_operand.vmem [shape: f32[20,128], index: 0, kind: input, shape index: {}]
  %s1 = inlined_call_operand.vmem [shape: f32[20,128], index: 1, kind: input, shape index: {}]
  %s2 = inlined_call_operand.vmem [shape: f32[2,8], index: 2, kind: input, shape index: {}]
  %s3 = inlined_call_operand.vmem [shape: f32[2,8], index: 3, kind: input, shape index: {}]
  %s4 = inlined_call_operand.vmem [shape: f32[2,6], index: 4, kind: input, shape index: {}]
  %s5 = inlined_call_operand.vmem [shape: f32[2,6], index: 5, kind: input, shape index: {}]
  %s6 = inlined_call_operand.vmem [shape: f32[1,128], index: 6, kind: output, shape index: {}]
  %s7 = sld [smem:[#allocation0]]
  $region73: #{concept_vae_loss.1} parent=0
    _
  %s9 = ssub.s32 1, %s7
  %s10 = scalar_select 0, %s9, %s7
  loop: start=0, step=1, limit=5
  $region2: #{concept_vae_loss.1} parent=0 // loop_pre_header
    _
  $region3: #{concept_vae_loss.1} parent=0 // loop_header
    %s12 = sphi 0, %s16
    %p13 = scmp.ge.s32.totalorder %s12, 5
    %s19 = sphi 0, %s31
    %s20 = sphi 0, %s27
    %s21 = sphi 0, %s19
    %s22 = sphi 0, %s20
    %s23 = sphi 0, %s21
    %s24 = sphi 0, %s22
    %s42 = sphi 0, %s44
    %s45 = sphi 0, %s42
    %s46 = sphi 0, %s45
    %s62 = sphi 0, %s46
    %s76 = sphi 0, %s78
    %s79 = sphi 0, %s76
    %s80 = sphi 0, %s79
    %s96 = sphi 0, %s80
    %s100 = sphi 0, %s100
    %s102 = sphi 0, %s100
    %s103 = sphi 0, %s102
    %s117 = sphi 0, %s103
    %s121 = sphi 0, %s121
    %s123 = sphi 0, %s121
    %s124 = sphi 0, %s123
    %s138 = sphi 0, %s124
    %s142 = sphi 0, %s142
    %s144 = sphi 0, %s142
    %s145 = sphi 0, %s144
    %s159 = sphi 0, %s145
    %s163 = sphi 0, %s163
    %s165 = sphi 0, %s163
    %s166 = sphi 0, %s165
    %s180 = sphi 0, %s166
    %s186 = sphi 0, %s188
    %s189 = sphi 0, %s186
    %s190 = sphi 0, %s189
    %s206 = sphi 0, %s190
  $region4: #{concept_vae_loss.1} parent=0 // loop_header_branch
    %15 = sbr.rel (%p13) target = $region8
  $region5: #{concept_vae_loss.1} parent=0 // loop_body
    %s17 = ssub.s32 %s12, 1
    %s18 = ssub.s32 %s12, 2
    %s25 = sadd.s32 1, %s20
    %p26 = scmp.ge.s32.totalorder %s25, 3
    %s27 = scalar_select %p26, 0, %s25
    %s28 = sadd.s32 1, %s19
    %s29 = scalar_select %p26, %s28, %s19
    %p30 = scmp.ge.s32.totalorder %s29, 1
    %s31 = scalar_select %p30, 0, %s29
    %s32 = smul.u32 %s19, 3
    %s33 = sadd.s32 %s32, %s20
    %p34 = scmp.lt.s32.totalorder %s33, 2
    %s35 = scalar_select %p34, %s33, 2
    %s36 = smul.u32 %s31, 3
    %s37 = sadd.s32 %s36, %s27
    %p38 = scmp.lt.s32.totalorder %s37, 2
    %s39 = scalar_select %p38, %s37, 2
    %s40 = ssub.s32 %s35, %s39
    %p41 = scmp.eq.s32.totalorder %s40, 0
    %s43 = sadd.s32 %s42, 1
    %s44 = scalar_select %p41, %s42, %s43
    %p47 = pneg %p41
    %p48 = scmp.eq.s32.totalorder %s12, 2
    %p49 = por %p47, %p48
    %p50 = scmp.ne.s32.totalorder %s42, %s45
    %p51 = scmp.eq.s32.totalorder %s12, 0
    %p52 = por %p50, %p51
    %p53 = scmp.ne.s32.totalorder %s42, %s45
    %p54 = scmp.eq.s32.totalorder %s17, 2
    %p55 = por %p53, %p54
    %p56 = scmp.ne.s32.totalorder %s45, %s46
    %p57 = scmp.eq.s32.totalorder %s17, 0
    %p58 = por %p56, %p57
    %p59 = scmp.ne.s32.totalorder %s45, %s46
    %p60 = scmp.eq.s32.totalorder %s18, 2
    %p61 = por %p59, %p60
    %p63 = scmp.ne.s32.totalorder %s46, %s62
    %p64 = scmp.eq.s32.totalorder %s18, 0
    %p65 = por %p63, %p64
    %s66 = smul.u32 %s19, 3
    %s67 = sadd.s32 %s66, %s20
    %p68 = scmp.lt.s32.totalorder %s67, 2
    %s69 = scalar_select %p68, %s67, 2
    %s70 = smul.u32 %s31, 3
    %s71 = sadd.s32 %s70, %s27
    %p72 = scmp.lt.s32.totalorder %s71, 2
    %s73 = scalar_select %p72, %s71, 2
    %s74 = ssub.s32 %s69, %s73
    %p75 = scmp.eq.s32.totalorder %s74, 0
    %s77 = sadd.s32 %s76, 1
    %s78 = scalar_select %p75, %s76, %s77
    %p81 = pneg %p75
    %p82 = scmp.eq.s32.totalorder %s12, 2
    %p83 = por %p81, %p82
    %p84 = scmp.ne.s32.totalorder %s76, %s79
    %p85 = scmp.eq.s32.totalorder %s12, 0
    %p86 = por %p84, %p85
    %p87 = scmp.ne.s32.totalorder %s76, %s79
    %p88 = scmp.eq.s32.totalorder %s17, 2
    %p89 = por %p87, %p88
    %p90 = scmp.ne.s32.totalorder %s79, %s80
    %p91 = scmp.eq.s32.totalorder %s17, 0
    %p92 = por %p90, %p91
    %p93 = scmp.ne.s32.totalorder %s79, %s80
    %p94 = scmp.eq.s32.totalorder %s18, 2
    %p95 = por %p93, %p94
    %p97 = scmp.ne.s32.totalorder %s80, %s96
    %p98 = scmp.eq.s32.totalorder %s18, 0
    %p99 = por %p97, %p98
    %s101 = sadd.s32 %s100, 1
    %p104 = scmp.eq.s32.totalorder %s12, 2
    %p105 = scmp.ne.s32.totalorder %s100, %s102
    %p106 = scmp.eq.s32.totalorder %s12, 0
    %p107 = por %p105, %p106
    %p108 = scmp.ne.s32.totalorder %s100, %s102
    %p109 = scmp.eq.s32.totalorder %s17, 2
    %p110 = por %p108, %p109
    %p111 = scmp.ne.s32.totalorder %s102, %s103
    %p112 = scmp.eq.s32.totalorder %s17, 0
    %p113 = por %p111, %p112
    %p114 = scmp.ne.s32.totalorder %s102, %s103
    %p115 = scmp.eq.s32.totalorder %s18, 2
    %p116 = por %p114, %p115
    %p118 = scmp.ne.s32.totalorder %s103, %s117
    %p119 = scmp.eq.s32.totalorder %s18, 0
    %p120 = por %p118, %p119
    %s122 = sadd.s32 %s121, 1
    %p125 = scmp.eq.s32.totalorder %s12, 2
    %p126 = scmp.ne.s32.totalorder %s121, %s123
    %p127 = scmp.eq.s32.totalorder %s12, 0
    %p128 = por %p126, %p127
    %p129 = scmp.ne.s32.totalorder %s121, %s123
    %p130 = scmp.eq.s32.totalorder %s17, 2
    %p131 = por %p129, %p130
    %p132 = scmp.ne.s32.totalorder %s123, %s124
    %p133 = scmp.eq.s32.totalorder %s17, 0
    %p134 = por %p132, %p133
    %p135 = scmp.ne.s32.totalorder %s123, %s124
    %p136 = scmp.eq.s32.totalorder %s18, 2
    %p137 = por %p135, %p136
    %p139 = scmp.ne.s32.totalorder %s124, %s138
    %p140 = scmp.eq.s32.totalorder %s18, 0
    %p141 = por %p139, %p140
    %s143 = sadd.s32 %s142, 1
    %p146 = scmp.eq.s32.totalorder %s12, 2
    %p147 = scmp.ne.s32.totalorder %s142, %s144
    %p148 = scmp.eq.s32.totalorder %s12, 0
    %p149 = por %p147, %p148
    %p150 = scmp.ne.s32.totalorder %s142, %s144
    %p151 = scmp.eq.s32.totalorder %s17, 2
    %p152 = por %p150, %p151
    %p153 = scmp.ne.s32.totalorder %s144, %s145
    %p154 = scmp.eq.s32.totalorder %s17, 0
    %p155 = por %p153, %p154
    %p156 = scmp.ne.s32.totalorder %s144, %s145
    %p157 = scmp.eq.s32.totalorder %s18, 2
    %p158 = por %p156, %p157
    %p160 = scmp.ne.s32.totalorder %s145, %s159
    %p161 = scmp.eq.s32.totalorder %s18, 0
    %p162 = por %p160, %p161
    %s164 = sadd.s32 %s163, 1
    %p167 = scmp.eq.s32.totalorder %s12, 2
    %p168 = scmp.ne.s32.totalorder %s163, %s165
    %p169 = scmp.eq.s32.totalorder %s12, 0
    %p170 = por %p168, %p169
    %p171 = scmp.ne.s32.totalorder %s163, %s165
    %p172 = scmp.eq.s32.totalorder %s17, 2
    %p173 = por %p171, %p172
    %p174 = scmp.ne.s32.totalorder %s165, %s166
    %p175 = scmp.eq.s32.totalorder %s17, 0
    %p176 = por %p174, %p175
    %p177 = scmp.ne.s32.totalorder %s165, %s166
    %p178 = scmp.eq.s32.totalorder %s18, 2
    %p179 = por %p177, %p178
    %p181 = scmp.ne.s32.totalorder %s166, %s180
    %p182 = scmp.eq.s32.totalorder %s18, 0
    %p183 = por %p181, %p182
    %s184 = ssub.s32 %s19, %s31
    %p185 = scmp.eq.s32.totalorder %s184, 0
    %s187 = sadd.s32 %s186, 1
    %s188 = scalar_select %p185, %s186, %s187
    %p191 = pneg %p185
    %p192 = scmp.eq.s32.totalorder %s12, 2
    %p193 = por %p191, %p192
    %p194 = scmp.ne.s32.totalorder %s186, %s189
    %p195 = scmp.eq.s32.totalorder %s12, 0
    %p196 = por %p194, %p195
    %p197 = scmp.ne.s32.totalorder %s186, %s189
    %p198 = scmp.eq.s32.totalorder %s17, 2
    %p199 = por %p197, %p198
    %p200 = scmp.ne.s32.totalorder %s189, %s190
    %p201 = scmp.eq.s32.totalorder %s17, 0
    %p202 = por %p200, %p201
    %p203 = scmp.ne.s32.totalorder %s189, %s190
    %p204 = scmp.eq.s32.totalorder %s18, 2
    %p205 = por %p203, %p204
    %p207 = scmp.ne.s32.totalorder %s190, %s206
    %p208 = scmp.eq.s32.totalorder %s18, 0
    %p209 = por %p207, %p208
    %p210 = scmp.le.s32.totalorder 1, %s12
    %p211 = scmp.lt.s32.totalorder %s12, 4
    %p212 = pnand %p210, %p211
    %p213 = pneg %p212
    // Predicated region
    $region9: #{concept_vae_loss.1} parent=5 // pred_check
      _
    $region10: #{concept_vae_loss.1} parent=5 // pred_check_branch
      %215 = sbr.rel (%p212) target = $region12
    $region11: #{concept_vae_loss.1} parent=5 // pred_region
      %s216 = ssub.s32 %s12, 1
      // Predicated region
      $region13: #{concept_vae_loss.1} parent=11 // pred_check
        %p217 = pneg %p113
      $region14: #{concept_vae_loss.1} parent=11 // pred_check_branch
        %219 = sbr.rel (%p217) target = $region16
      $region15: #{concept_vae_loss.1} parent=11 // pred_region
        _
      $region16: #{concept_vae_loss.1} parent=11 // pred_fallthru
        _
      // Predicated region
      $region17: #{concept_vae_loss.1} parent=11 // pred_check
        %p220 = pneg %p134
      $region18: #{concept_vae_loss.1} parent=11 // pred_check_branch
        %222 = sbr.rel (%p220) target = $region20
      $region19: #{concept_vae_loss.1} parent=11 // pred_region
        _
      $region20: #{concept_vae_loss.1} parent=11 // pred_fallthru
        _
      // Predicated region
      $region21: #{concept_vae_loss.1} parent=11 // pred_check
        %p223 = pneg %p155
      $region22: #{concept_vae_loss.1} parent=11 // pred_check_branch
        %225 = sbr.rel (%p223) target = $region24
      $region23: #{concept_vae_loss.1} parent=11 // pred_region
        _
      $region24: #{concept_vae_loss.1} parent=11 // pred_fallthru
        _
      // Predicated region
      $region25: #{concept_vae_loss.1} parent=11 // pred_check
        %p226 = pneg %p176
      $region26: #{concept_vae_loss.1} parent=11 // pred_check_branch
        %228 = sbr.rel (%p226) target = $region28
      $region27: #{concept_vae_loss.1} parent=11 // pred_region
        _
      $region28: #{concept_vae_loss.1} parent=11 // pred_fallthru
        _
    $region12: #{concept_vae_loss.1} parent=5 // pred_fallthru
      _
    %p229 = scmp.lt.s32.totalorder %s12, 3
    // Predicated region
    $region29: #{concept_vae_loss.1} parent=5 // pred_check
      %p230 = pneg %p229
    $region30: #{concept_vae_loss.1} parent=5 // pred_check_branch
      %232 = sbr.rel (%p230) target = $region32
    $region31: #{concept_vae_loss.1} parent=5 // pred_region
      // Predicated region
      $region33: #{concept_vae_loss.1} parent=31 // pred_check
        %p233 = pneg %p52
      $region34: #{concept_vae_loss.1} parent=31 // pred_check_branch
        %235 = sbr.rel (%p233) target = $region36
      $region35: #{concept_vae_loss.1} parent=31 // pred_region
        %s236 = smul.u32 %s19, 3
        %s237 = sadd.s32 %s236, %s20
        %p238 = scmp.lt.s32.totalorder %s237, 2
        %s239 = scalar_select %p238, %s237, 2
        %p240 = scmp.lt.s32.totalorder %s239, 2
        %s241 = scalar_select %p240, %s239, 2
        %s242 = smul.addr %s241, 8
        %s243 = scalar_lea.vmem %s0, %s242
        %s244 = smul.u32 %s19, 3
        %s245 = sadd.s32 %s244, %s20
        %p246 = scmp.lt.s32.totalorder %s245, 2
        %s247 = scalar_select %p246, %s245, 2
      $region36: #{concept_vae_loss.1} parent=31 // pred_fallthru
        _
      // Predicated region
      $region37: #{concept_vae_loss.1} parent=31 // pred_check
        %p248 = pneg %p86
      $region38: #{concept_vae_loss.1} parent=31 // pred_check_branch
        %250 = sbr.rel (%p248) target = $region40
      $region39: #{concept_vae_loss.1} parent=31 // pred_region
        %s251 = smul.u32 %s19, 3
        %s252 = sadd.s32 %s251, %s20
        %p253 = scmp.lt.s32.totalorder %s252, 2
        %s254 = scalar_select %p253, %s252, 2
        %p255 = scmp.lt.s32.totalorder %s254, 2
        %s256 = scalar_select %p255, %s254, 2
        %s257 = smul.addr %s256, 8
        %s258 = scalar_lea.vmem %s1, %s257
        %s259 = smul.u32 %s19, 3
        %s260 = sadd.s32 %s259, %s20
        %p261 = scmp.lt.s32.totalorder %s260, 2
        %s262 = scalar_select %p261, %s260, 2
      $region40: #{concept_vae_loss.1} parent=31 // pred_fallthru
        _
    $region32: #{concept_vae_loss.1} parent=5 // pred_fallthru
      _
    %p263 = scmp.le.s32.totalorder 1, %s12
    %p264 = scmp.lt.s32.totalorder %s12, 4
    %p265 = pnand %p263, %p264
    %p266 = pneg %p265
    // Predicated region
    $region41: #{concept_vae_loss.1} parent=5 // pred_check
      _
    $region42: #{concept_vae_loss.1} parent=5 // pred_check_branch
      %268 = sbr.rel (%p265) target = $region44
    $region43: #{concept_vae_loss.1} parent=5 // pred_region
      %s269 = ssub.s32 %s12, 1
      %s270 = smul.u32 %s21, 3
      %s271 = sadd.s32 %s270, %s22
      %p272 = scmp.lt.s32.totalorder %s271, 2
      %s273 = scalar_select %p272, %s271, 2
      %p274 = scmp.lt.s32.totalorder %s273, 2
      %s275 = scalar_select %p274, %s273, 2
      %s276 = smul.addr %s275, 8
      %s277 = scalar_lea.vmem %s0, %s276
      %p278 = pneg %p58
      %p279 = pneg %p55
      %s280 = smul.u32 %s21, 3
      %s281 = sadd.s32 %s280, %s22
      %p282 = scmp.lt.s32.totalorder %s281, 2
      %s283 = scalar_select %p282, %s281, 2
      %p284 = scmp.lt.s32.totalorder %s283, 2
      %s285 = scalar_select %p284, %s283, 2
      %s286 = smul.addr %s285, 8
      %s287 = scalar_lea.vmem %s1, %s286
      %p288 = pneg %p92
      %p289 = pneg %p89
      %p290 = pneg %p113
      %p291 = pneg %p110
      %p292 = pneg %p134
      %p293 = pneg %p131
      %p294 = pneg %p155
      %p295 = pneg %p152
      %p296 = pneg %p176
      %p297 = pneg %p173
      %p298 = pneg %p202
      %p299 = pneg %p199
      %p300 = scmp.lt.s32.totalorder %s21, 0
      %s301 = scalar_select %p300, %s21, 0
      %s302 = scalar_lea.vmem %s6, %s301
      %s303 = smul.u32 %s21, 3
      %s304 = sadd.s32 %s303, %s22
      %p305 = scmp.lt.s32.totalorder %s304, 2
      %s306 = scalar_select %p305, %s304, 2
      %p307 = scmp.lt.s32.totalorder %s306, 2
      %s308 = scalar_select %p307, %s306, 2
      %s309 = smul.addr %s308, 8
      %s310 = scalar_lea.vmem %s0, %s309
      %s311 = smul.u32 %s21, 3
      %s312 = sadd.s32 %s311, %s22
      %p313 = scmp.lt.s32.totalorder %s312, 2
      %s314 = scalar_select %p313, %s312, 2
      %s315 = smul.u32 %s21, 3
      %s316 = sadd.s32 %s315, %s22
      %p317 = scmp.lt.s32.totalorder %s316, 2
      %s318 = scalar_select %p317, %s316, 2
      %p319 = scmp.lt.s32.totalorder %s318, 2
      %s320 = scalar_select %p319, %s318, 2
      %s321 = smul.addr %s320, 8
      %s322 = scalar_lea.vmem %s1, %s321
      %s323 = smul.u32 %s21, 3
      %s324 = sadd.s32 %s323, %s22
      %p325 = scmp.lt.s32.totalorder %s324, 2
      %s326 = scalar_select %p325, %s324, 2
      %p327 = scmp.lt.s32.totalorder %s21, 0
      %s328 = scalar_select %p327, %s21, 0
      %s329 = scalar_lea.vmem %s6, %s328
      %s330 = smul.u32 %s21, 3
      %s331 = sadd.s32 %s330, %s22
      %s332 = smul.u32 %s331, 8
      %v333 = vlaneseq
      %v334 = vshrl.u32 %v333, 7
      %v335 = vstv %s332
      %v336 = vadd.s32 %v335, %v334
      %vm337 = vcmp.lt.s32.totalorder %v336, 20
      %v338 = vld [vmem:[%s310] sm:$0xff]
      %v339 = vld [vmem:[%s322] sm:$0xff]
      %v340 = vsub.f32 %v338, %v339
      %v341 = vsel %vm337, %v340, 0.0
      %v342 = vmul.f32 %v341, %v341
      %p343 = scmp.eq.s32.totalorder %s22, 0
      // Predicated region
      $region45: #{concept_vae_loss.1} parent=43 // pred_check
        %p344 = pneg %p343
      $region46: #{concept_vae_loss.1} parent=43 // pred_check_branch
        %346 = sbr.rel (%p344) target = $region48
      $region47: #{concept_vae_loss.1} parent=43 // pred_region
        %347 = vst [vmem:[#allocation2] sm:$0xff] %v342
      $region48: #{concept_vae_loss.1} parent=43 // pred_fallthru
        _
      %p348 = scmp.ne.s32.totalorder %s22, 0
      // Predicated region
      $region49: #{concept_vae_loss.1} parent=43 // pred_check
        %p349 = pneg %p348
      $region50: #{concept_vae_loss.1} parent=43 // pred_check_branch
        %351 = sbr.rel (%p349) target = $region52
      $region51: #{concept_vae_loss.1} parent=43 // pred_region
        %v352 = vld [vmem:[#allocation2] sm:$0xff]
        %v353 = vadd.f32 %v352, %v342
        %354 = vst [vmem:[#allocation2] sm:$0xff] %v353
      $region52: #{concept_vae_loss.1} parent=43 // pred_fallthru
        _
      %p355 = scmp.eq.s32.totalorder %s22, 2
      // Predicated region
      $region53: #{concept_vae_loss.1} parent=43 // pred_check
        %p356 = pneg %p355
      $region54: #{concept_vae_loss.1} parent=43 // pred_check_branch
        %358 = sbr.rel (%p356) target = $region56
      $region55: #{concept_vae_loss.1} parent=43 // pred_region
        %v359 = vld [vmem:[#allocation2] sm:$0xff]
        %360 = vadd.xlane.f32.xlu0 %v359
        %v361 = vpop.xlane.xlu0 %360
        %v362 = vrot.slane %v361, 4
        %v363 = vadd.f32 %v361, %v362
        %v364 = vrot.slane %v363, 2
        %v365 = vadd.f32 %v363, %v364
        %v366 = vrot.slane %v365, 1
        %v367 = vadd.f32 %v365, %v366
        %s368 = vtos %v367
        %v369 = vlaneseq
        %v370 = vand.u32 %v369, 127
        %vm371 = vcmp.eq.s32.totalorder %v370, 0
        %v372 = vstv %s368
        %v373 = vsel %vm371, %v372, 0.0
        %374 = vst [vmem:[%s329] sm:$0x1] %v373
        %p375 = scmp.eq.s32.totalorder %s21, 0
        // Predicated region
        $region57: #{concept_vae_loss.1} parent=55 // pred_check
          %p376 = pneg %p375
        $region58: #{concept_vae_loss.1} parent=55 // pred_check_branch
          %378 = sbr.rel (%p376) target = $region60
        $region59: #{concept_vae_loss.1} parent=55 // pred_region
          %v379 = vld [vmem:[%s2] sm:$0x3]
          %v380 = vld [vmem:[%s3] sm:$0x3]
          %v381 = vlog2.pop %v379
          %v382 = vmul.f32 %v381, 0.6931472
          %v383 = vmax.f32 %v382, -100.0
          %v384 = vsub.f32 1.0, %v379
          %v385 = vlog2.pop %v384
          %v386 = vmul.f32 %v385, 0.6931472
          %v387 = vmax.f32 %v386, -100.0
          %v388 = vmul.f32 %v380, %v383
          %v389 = vsub.f32 1.0, %v380
          %v390 = vmul.f32 %v389, %v387
          %v391 = vadd.f32 %v388, %v390
          %v392 = vsub.f32 0.0, %v391
          %vm393 = vcmask 58368
          %v394 = vsel %vm393, %v392, 0.0
          %395 = vadd.xlane.f32.xlu0 %v394
          %v396 = vpop.xlane.xlu0 %395
          %v397 = vrot.slane %v396, 4
          %v398 = vadd.f32 %v396, %v397
          %v399 = vrot.slane %v398, 2
          %v400 = vadd.f32 %v398, %v399
          %v401 = vrot.slane %v400, 1
          %v402 = vadd.f32 %v400, %v401
          %s403 = vtos %v402
          %vm404 = vcmp.eq.s32.totalorder %v370, 1
          %v405 = vstv %s403
          %v406 = vsel %vm404, %v405, 0.0
          %v407 = vld [vmem:[%s4] sm:$0x3]
          %v408 = vld [vmem:[%s5] sm:$0x3]
          %v409 = vand.u32 2147483647, %v407
          %v410 = vsub.f32 0.0, %v409
          %v411 = vmul.f32 %v410, 1.442695
          %v412 = vpow.pop %v411
          %v413 = vadd.f32 %v412, 1.0
          %v414 = vlog2.pop %v413
          %v415 = vmul.f32 %v414, 0.6931472
          %v416 = vmul.f32 -0.5, %v412
          %v417 = vadd.f32 %v416, 1.0
          %v418 = vmul.f32 %v417, %v412
          %v419 = vand.u32 2147483647, %v412
          %vm420 = vcmp.lt.f32.partialorder %v419, 0.0004427343
          %v421 = vsel %vm420, %v418, %v415
          %v422 = vsub.f32 0.0, %v407
          %v423 = vmax.f32 %v422, 0.0
          %v424 = vadd.f32 %v423, %v421
          %v425 = vsub.f32 0.0, %v424
          %v426 = vmax.f32 %v425, -100.0
          %v427 = vmax.f32 %v407, 0.0
          %v428 = vadd.f32 %v427, %v421
          %v429 = vsub.f32 0.0, %v428
          %v430 = vmax.f32 %v429, -100.0
          %v431 = vmul.f32 %v408, %v426
          %v432 = vsub.f32 1.0, %v408
          %v433 = vmul.f32 %v432, %v430
          %v434 = vadd.f32 %v431, %v433
          %v435 = vsub.f32 0.0, %v434
          %vm436 = vcmask 41984
          %v437 = vsel %vm436, %v435, 0.0
          %438 = vadd.xlane.f32.xlu0 %v437
          %v439 = vpop.xlane.xlu0 %438
          %v440 = vrot.slane %v439, 4
          %v441 = vadd.f32 %v439, %v440
          %v442 = vrot.slane %v441, 2
          %v443 = vadd.f32 %v441, %v442
          %v444 = vrot.slane %v443, 1
          %v445 = vadd.f32 %v443, %v444
          %s446 = vtos %v445
          %vm447 = vcmp.eq.s32.totalorder %v370, 2
          %v448 = vstv %s446
          %v449 = vsel %vm447, %v448, 0.0
          %v450 = vadd.f32 %v406, %v449
          %v451 = vld [vmem:[%s329] sm:$0x1]
          %v452 = vadd.f32 %v451, %v450
          %453 = vst [vmem:[%s329] sm:$0x1] %v452
        $region60: #{concept_vae_loss.1} parent=55 // pred_fallthru
          _
      $region56: #{concept_vae_loss.1} parent=43 // pred_fallthru
        _
      %p454 = scmp.lt.s32.totalorder %s21, 0
      %s455 = scalar_select %p454, %s21, 0
      %s456 = scalar_lea.vmem %s6, %s455
      // Predicated region
      $region61: #{concept_vae_loss.1} parent=43 // pred_check
        %p457 = pneg %p199
      $region62: #{concept_vae_loss.1} parent=43 // pred_check_branch
        %459 = sbr.rel (%p457) target = $region64
      $region63: #{concept_vae_loss.1} parent=43 // pred_region
        _
      $region64: #{concept_vae_loss.1} parent=43 // pred_fallthru
        _
      // Predicated region
      $region65: #{concept_vae_loss.1} parent=43 // pred_check
        %p460 = pneg %p199
      $region66: #{concept_vae_loss.1} parent=43 // pred_check_branch
        %462 = sbr.rel (%p460) target = $region68
      $region67: #{concept_vae_loss.1} parent=43 // pred_region
        %p463 = scmp.lt.s32.totalorder %s21, 0
        %s464 = scalar_select %p463, %s21, 0
        %s465 = scalar_lea.vmem %s6, %s464
      $region68: #{concept_vae_loss.1} parent=43 // pred_fallthru
        _
    $region44: #{concept_vae_loss.1} parent=5 // pred_fallthru
      _
    %p466 = scmp.le.s32.totalorder 2, %s12
    // Predicated region
    $region69: #{concept_vae_loss.1} parent=5 // pred_check
      %p467 = pneg %p466
    $region70: #{concept_vae_loss.1} parent=5 // pred_check_branch
      %469 = sbr.rel (%p467) target = $region72
    $region71: #{concept_vae_loss.1} parent=5 // pred_region
      %s470 = ssub.s32 %s12, 2
    $region72: #{concept_vae_loss.1} parent=5 // pred_fallthru
      _
  $region6: #{concept_vae_loss.1} parent=0 // loop_footer
    %s16 = sadd.s32 1, %s12
  $region7: #{concept_vae_loss.1} parent=0 // loop_footer_branch
    %11 = sbr.rel target = $region3
  $region8: #{concept_vae_loss.1} parent=0 // loop_exit
    _

</llo_original>
